<compile_context>
chip_gen: v5e
topology: v5e:2x2
jax: 0.10.0
libtpu: 0.0.40
codegen_flags: <defaults>
</compile_context>

<pallas_src>
import functools

import jax
import jax.numpy as jnp
from jax.experimental import pallas as pl
from jax.experimental.pallas import tpu as pltpu

_LANE = 128
_SUBLANE = 8


def _cdiv(a, b):
    return -(-a // b)


def _round_up(v, m):
    return _cdiv(v, m) * m


def _pool_kernel(x_ref, w_ref, out_ref, avg_acc, attn_acc, *,
                 inv_hw, hw_total, hw_tile, mask_hw):
    # x_ref:    (TB, C, T_HW)  one spatial chunk of TB batch rows
    # w_ref:    (1, C, 1)      1x1-conv weight (resident; constant index_map)
    # out_ref:  (TB, 2C)       avg in [:, :C], attn in [:, C:]
    # avg_acc/attn_acc: (TB, C) f32 scratch accumulators (persist across HW steps)
    h = pl.program_id(1)

    @pl.when(h == 0)
    def _init():
        # Scratch persists across grid steps -> re-zero at the first HW chunk
        # of every batch block.
        avg_acc[...] = jnp.zeros_like(avg_acc)
        attn_acc[...] = jnp.zeros_like(attn_acc)

    x = x_ref[...].astype(jnp.float32)                    # (TB, C, T_HW), f32 accumulate
    if mask_hw:
        # Ragged HW tail: zero out-of-range pixels in-register instead of
        # padding x in HBM.  Zeroed x contributes 0 to both reductions.
        pos = h * hw_tile + jax.lax.broadcasted_iota(jnp.int32, (1, 1, hw_tile), 2)
        x = jnp.where(pos < hw_total, x, 0.0)

    w = w_ref[...].astype(jnp.float32)                    # (1, C, 1)

    # Global average pool: partial sum over this HW chunk.
    avg_acc[...] += jnp.sum(x, axis=-1)

    # 1x1 conv (no bias) collapsing channels -> per-pixel attention logit.
    logit = jnp.sum(x * w, axis=1, keepdims=True)         # (TB, 1, T_HW)
    a = jax.nn.sigmoid(logit)                             # (TB, 1, T_HW)

    # Attention-weighted global sum pool: partial sum over this HW chunk.
    attn_acc[...] += jnp.sum(x * a, axis=-1)

    @pl.when(h == pl.num_programs(1) - 1)
    def _finalize():
        # Divide by the TRUE HW only here.  Two direct sliced stores instead
        # of a lane-axis concatenate.
        c = avg_acc.shape[1]
        out_ref[:, :c] = (avg_acc[...] * inv_hw).astype(out_ref.dtype)
        out_ref[:, c:] = attn_acc[...].astype(out_ref.dtype)


def global_avg_attn_pool2d(x_nchw, weight, *, batch_tile=None, hw_tile=None,
                           target_block_bytes=8 << 20,
                           vmem_cap_bytes=48 << 20):
    """GlobalAvgAttnPool2d forward.

    x_nchw: (N, C, H, W) float32 or bfloat16.
    weight: (1, C) / (C,) / (1, C, 1, 1) float32 -- the 1x1 conv weight, no bias.
    Returns (N, 2*C, 1, 1) float32, matching torch.cat([avg, attn], dim=1).
    """
    N, C, H, W = x_nchw.shape
    HW = H * W

    x = x_nchw.reshape(N, C, HW)                          # keep input dtype (bf16 OK)
    w = jnp.asarray(weight, jnp.float32).reshape(1, C, 1)
    itemsize = jnp.dtype(x.dtype).itemsize

    c_pad = _round_up(C, _SUBLANE)
    tb_min = min(N, _SUBLANE)

    # ---- spatial tile (full HW when it fits; else multiple of 128, cdiv grid) ----
    if hw_tile is None:
        if c_pad * HW * 4 * tb_min <= target_block_bytes or HW <= _LANE:
            hw_tile = HW                                  # full extent: no pad, no mask
        else:
            max_lanes = max(1, target_block_bytes // (c_pad * 4 * tb_min * _LANE))
            hw_tile = min(max_lanes * _LANE, (HW // _LANE) * _LANE)
    else:
        hw_tile = int(hw_tile)
        hw_tile = HW if hw_tile >= HW else max(_LANE, (hw_tile // _LANE) * _LANE)
    grid_h = _cdiv(HW, hw_tile)
    mask_hw = (HW % hw_tile) != 0

    # ---- batch tile (8-aligned when split; >=2 blocks for megacore when N>=16) ----
    col_f32 = c_pad * hw_tile * 4
    if batch_tile is not None:
        tb = max(1, int(batch_tile))
    else:
        tb_cap = max(1, target_block_bytes // col_f32)
        if N <= _SUBLANE:
            tb = N                                        # single full-dim output block
        else:
            tb = (tb_cap // _SUBLANE) * _SUBLANE
            if tb == 0:
                tb = tb_cap                               # VMEM-tight fallback (masked stores)
            if N >= 2 * _SUBLANE:
                tb = min(tb, _round_up(_cdiv(N, 2), _SUBLANE))   # keep >= 2 batch blocks
            tb = min(tb, _round_up(N, _SUBLANE))
    if tb >= N:
        tb = N

    # ---- VMEM working-set estimate; shrink tb if it would exceed the cap ----
    def _estimate(tb_):
        in_blk = tb_ * c_pad * hw_tile * itemsize         # input block (x2 double buffer)
        f32_blk = tb_ * c_pad * hw_tile * 4               # f32 upcast + product temps (x3)
        out_blk = tb_ * _round_up(2 * C, _LANE) * 4
        scr = 2 * tb_ * c_pad * 4
        return 2 * in_blk + 3 * f32_blk + 2 * out_blk + scr

    while tb > 1 and _estimate(tb) > vmem_cap_bytes - (4 << 20):
        tb = tb - _SUBLANE if tb > _SUBLANE else max(1, tb // 2)

    grid_b = _cdiv(N, tb)
    n_out = grid_b * tb                                   # output allocated padded (tiny)

    vmem_limit = int(min(vmem_cap_bytes,
                         max(32 << 20, _estimate(tb) + (4 << 20))))

    cost = pl.CostEstimate(
        flops=5 * N * C * HW,
        transcendentals=N * HW,
        bytes_accessed=N * C * HW * itemsize + C * 4 + N * 2 * C * 4,
    )

    kernel = functools.partial(_pool_kernel, inv_hw=1.0 / float(HW),
                               hw_total=HW, hw_tile=hw_tile, mask_hw=mask_hw)

    out = pl.pallas_call(
        kernel,
        out_shape=jax.ShapeDtypeStruct((n_out, 2 * C), jnp.float32),
        grid_spec=pltpu.PrefetchScalarGridSpec(
            num_scalar_prefetch=0,
            grid=(grid_b, grid_h),                        # (batch blocks, HW chunks)
            in_specs=[
                pl.BlockSpec((tb, C, hw_tile), lambda b, h: (b, 0, h)),
                pl.BlockSpec((1, C, 1), lambda b, h: (0, 0, 0)),   # weight resident
            ],
            out_specs=pl.BlockSpec((tb, 2 * C), lambda b, h: (b, 0)),
            scratch_shapes=[
                pltpu.VMEM((tb, C), jnp.float32),         # avg accumulator
                pltpu.VMEM((tb, C), jnp.float32),         # attn accumulator
            ],
        ),
        compiler_params=pltpu.CompilerParams(
            dimension_semantics=("parallel", "arbitrary"),
            vmem_limit_bytes=vmem_limit,
        ),
        cost_estimate=cost,
    )(x, w)

    return out[:N].reshape(N, 2 * C, 1, 1)


def _reference(x_nchw, weight):
    # Pure-JAX reference of the PyTorch forward (f32).
    x = x_nchw.astype(jnp.float32)
    weight = jnp.asarray(weight, jnp.float32).reshape(1, -1)
    avg = jnp.mean(x, axis=(2, 3), keepdims=True)                          # (N,C,1,1)
    logit = jnp.einsum("nchw,oc->nohw", x, weight)                         # (N,1,H,W)
    a = jax.nn.sigmoid(logit)
    attn = jnp.sum(x * a, axis=(2, 3), keepdims=True)                      # (N,C,1,1)
    return jnp.concatenate([avg, attn], axis=1)                            # (N,2C,1,1)


if __name__ == "__main__":
    key = jax.random.PRNGKey(0)
    kx, kw = jax.random.split(key)

    N, C, H, W = 2, 4, 16, 16
    x = jax.random.normal(kx, (N, C, H, W), dtype=jnp.float32)
    bound = 1.0 / (C ** 0.5)
    weight = jax.random.uniform(kw, (1, C), dtype=jnp.float32,
                                minval=-bound, maxval=bound)
    ref = _reference(x, weight)

    # 1) Default tiling: whole spatial extent, single batch block.
    out = jax.block_until_ready(global_avg_attn_pool2d(x, weight))
    assert out.shape == (N, 2 * C, 1, 1), out.shape
    assert jnp.allclose(out, ref, atol=1e-5, rtol=1e-5), "default-tiling mismatch"

    # 2) Forced HW chunking: exercises the accumulator init/finalize path.
    out2 = jax.block_until_ready(
        global_avg_attn_pool2d(x, weight, batch_tile=2, hw_tile=128))
    assert jnp.allclose(out2, ref, atol=1e-5, rtol=1e-5), "chunked mismatch"

    # 3) Ragged HW tail: in-kernel masking (no HBM padding pass).
    x3 = jax.random.normal(jax.random.PRNGKey(1), (2, 8, 13, 11), dtype=jnp.float32)
    w3 = jax.random.uniform(jax.random.PRNGKey(2), (1, 8), dtype=jnp.float32,
                            minval=-0.3, maxval=0.3)
    out3 = jax.block_until_ready(global_avg_attn_pool2d(x3, w3, hw_tile=128))
    assert jnp.allclose(out3, _reference(x3, w3), atol=1e-5, rtol=1e-5), \
        "ragged-HW mismatch"

    # 4) Batch that does not divide the 8-aligned batch tile (clipped tail block).
    x4 = jax.random.normal(jax.random.PRNGKey(3), (10, 8, 6, 6), dtype=jnp.float32)
    w4 = jax.random.uniform(jax.random.PRNGKey(4), (1, 8), dtype=jnp.float32,
                            minval=-0.3, maxval=0.3)
    out4 = jax.block_until_ready(global_avg_attn_pool2d(x4, w4, batch_tile=8))
    assert jnp.allclose(out4, _reference(x4, w4), atol=1e-5, rtol=1e-5), \
        "ragged-batch mismatch"

    # 5) Auto multi-batch-block tiling (N=16 -> two 8-row blocks; megacore-ready).
    x5 = jax.random.normal(jax.random.PRNGKey(5), (16, 8, 12, 12), dtype=jnp.float32)
    w5 = jax.random.uniform(jax.random.PRNGKey(6), (1, 8), dtype=jnp.float32,
                            minval=-0.3, maxval=0.3)
    out5 = jax.block_until_ready(global_avg_attn_pool2d(x5, w5))
    assert jnp.allclose(out5, _reference(x5, w5), atol=1e-5, rtol=1e-5), \
        "multi-batch-block mismatch"

    # 6) bf16 input: half the HBM traffic; f32 accumulation inside the kernel.
    out_bf16 = jax.block_until_ready(
        global_avg_attn_pool2d(x.astype(jnp.bfloat16), weight))
    ref_bf16 = _reference(x.astype(jnp.bfloat16), weight)
    assert jnp.allclose(out_bf16, ref_bf16, atol=2e-2, rtol=2e-2), "bf16 mismatch"

    print("KERNEL_OK")
</pallas_src>

<mosaic_0001>
module attributes {stable_mosaic.version = 11 : i64} {
  func.func @_pool_kernel(%arg0: i32, %arg1: i32, %arg2: memref<2x4x256xf32, #tpu.memory_space<vmem>>, %arg3: memref<1x4x1xf32, #tpu.memory_space<vmem>>, %arg4: memref<2x8xf32, #tpu.memory_space<vmem>>, %arg5: memref<2x4xf32, #tpu.memory_space<vmem>>, %arg6: memref<2x4xf32, #tpu.memory_space<vmem>>) attributes {dimension_semantics = [#tpu.dimension_semantics<parallel>, #tpu.dimension_semantics<arbitrary>], iteration_bounds = array<i64: 1, 1>, scalar_prefetch = 0 : i64, scratch_operands = 2 : i64, tpu.core_type = #tpu.core_type<tc>, window_params = [{transform_indices = @transform_0, window_bounds = array<i64: 2, 4, 256>}, {pipeline_mode = #tpu.pipeline_mode<synchronous>, transform_indices = @transform_1, window_bounds = array<i64: 1, 4, 1>}, {transform_indices = @transform_2, window_bounds = array<i64: 2, 8>}]} {
    %c0_i32 = arith.constant 0 : i32
    %0 = arith.cmpi eq, %arg1, %c0_i32 : i32
    %1 = arith.extui %0 : i1 to i32
    %c0_i32_0 = arith.constant 0 : i32
    %2 = arith.cmpi ne, %1, %c0_i32_0 : i32
    scf.if %2 {
      %cst_19 = arith.constant 0.000000e+00 : f32
      %27 = vector.broadcast %cst_19 : f32 to vector<2x4xf32>
      %c0_20 = arith.constant 0 : index
      %c0_21 = arith.constant 0 : index
      %28 = vector.load %arg5[%c0_20, %c0_21] : memref<2x4xf32, #tpu.memory_space<vmem>>, vector<2x4xf32>
      tpu.vector_store %arg5[%c0_20, %c0_21], %27 {strides = array<i32>} : memref<2x4xf32, #tpu.memory_space<vmem>>, vector<2x4xf32>,
      %cst_22 = arith.constant 0.000000e+00 : f32
      %29 = vector.broadcast %cst_22 : f32 to vector<2x4xf32>
      %c0_23 = arith.constant 0 : index
      %c0_24 = arith.constant 0 : index
      %30 = vector.load %arg6[%c0_23, %c0_24] : memref<2x4xf32, #tpu.memory_space<vmem>>, vector<2x4xf32>
      tpu.vector_store %arg6[%c0_23, %c0_24], %29 {strides = array<i32>} : memref<2x4xf32, #tpu.memory_space<vmem>>, vector<2x4xf32>,
    } else {
    }
    %c0 = arith.constant 0 : index
    %c0_1 = arith.constant 0 : index
    %c0_2 = arith.constant 0 : index
    %3 = vector.load %arg2[%c0, %c0_1, %c0_2] : memref<2x4x256xf32, #tpu.memory_space<vmem>>, vector<2x4x256xf32>
    %c0_3 = arith.constant 0 : index
    %c0_4 = arith.constant 0 : index
    %c0_5 = arith.constant 0 : index
    %4 = vector.load %arg3[%c0_3, %c0_4, %c0_5] : memref<1x4x1xf32, #tpu.memory_space<vmem>>, vector<1x4x1xf32>
    %c0_6 = arith.constant 0 : index
    %c0_7 = arith.constant 0 : index
    %5 = vector.load %arg5[%c0_6, %c0_7] : memref<2x4xf32, #tpu.memory_space<vmem>>, vector<2x4xf32>
    %cst = arith.constant dense<0.000000e+00> : vector<2x4xf32>
    %6 = vector.multi_reduction <add>, %3, %cst [2] : vector<2x4x256xf32> to vector<2x4xf32>
    %7 = arith.addf %5, %6 : vector<2x4xf32>
    %c0_8 = arith.constant 0 : index
    %c0_9 = arith.constant 0 : index
    %8 = vector.load %arg5[%c0_8, %c0_9] : memref<2x4xf32, #tpu.memory_space<vmem>>, vector<2x4xf32>
    tpu.vector_store %arg5[%c0_8, %c0_9], %7 {strides = array<i32>} : memref<2x4xf32, #tpu.memory_space<vmem>>, vector<2x4xf32>,
    %9 = vector.broadcast %4 : vector<1x4x1xf32> to vector<2x4x256xf32>
    %10 = arith.mulf %3, %9 : vector<2x4x256xf32>
    %cst_10 = arith.constant dense<0.000000e+00> : vector<2x256xf32>
    %11 = vector.multi_reduction <add>, %10, %cst_10 [1] : vector<2x4x256xf32> to vector<2x256xf32>
    %12 = vector.shape_cast %11 : vector<2x256xf32> to vector<2x1x256xf32>
    %13 = arith.negf %12 : vector<2x1x256xf32>
    %14 = math.exp %13 : vector<2x1x256xf32>
    %cst_11 = arith.constant 1.000000e+00 : f32
    %15 = vector.broadcast %cst_11 : f32 to vector<2x1x256xf32>
    %16 = arith.addf %15, %14 : vector<2x1x256xf32>
    %17 = arith.divf %15, %16 : vector<2x1x256xf32>
    %c0_12 = arith.constant 0 : index
    %c0_13 = arith.constant 0 : index
    %18 = vector.load %arg6[%c0_12, %c0_13] : memref<2x4xf32, #tpu.memory_space<vmem>>, vector<2x4xf32>
    %19 = vector.broadcast %17 : vector<2x1x256xf32> to vector<2x4x256xf32>
    %20 = arith.mulf %3, %19 : vector<2x4x256xf32>
    %cst_14 = arith.constant dense<0.000000e+00> : vector<2x4xf32>
    %21 = vector.multi_reduction <add>, %20, %cst_14 [2] : vector<2x4x256xf32> to vector<2x4xf32>
    %22 = arith.addf %18, %21 : vector<2x4xf32>
    %c0_15 = arith.constant 0 : index
    %c0_16 = arith.constant 0 : index
    %23 = vector.load %arg6[%c0_15, %c0_16] : memref<2x4xf32, #tpu.memory_space<vmem>>, vector<2x4xf32>
    tpu.vector_store %arg6[%c0_15, %c0_16], %22 {strides = array<i32>} : memref<2x4xf32, #tpu.memory_space<vmem>>, vector<2x4xf32>,
    %c0_i32_17 = arith.constant 0 : i32
    %24 = arith.cmpi eq, %arg1, %c0_i32_17 : i32
    %25 = arith.extui %24 : i1 to i32
    %c0_i32_18 = arith.constant 0 : i32
    %26 = arith.cmpi ne, %25, %c0_i32_18 : i32
    scf.if %26 {
      %c0_19 = arith.constant 0 : index
      %c0_20 = arith.constant 0 : index
      %27 = vector.load %arg5[%c0_19, %c0_20] : memref<2x4xf32, #tpu.memory_space<vmem>>, vector<2x4xf32>
      %cst_21 = arith.constant 3.906250e-03 : f32
      %28 = vector.broadcast %cst_21 : f32 to vector<2x4xf32>
      %29 = arith.mulf %27, %28 : vector<2x4xf32>
      %c0_22 = arith.constant 0 : index
      %c0_23 = arith.constant 0 : index
      %30 = vector.load %arg4[%c0_22, %c0_23] : memref<2x8xf32, #tpu.memory_space<vmem>>, vector<2x4xf32>
      tpu.vector_store %arg4[%c0_22, %c0_23], %29 {strides = array<i32>} : memref<2x8xf32, #tpu.memory_space<vmem>>, vector<2x4xf32>,
      %c0_24 = arith.constant 0 : index
      %c0_25 = arith.constant 0 : index
      %31 = vector.load %arg6[%c0_24, %c0_25] : memref<2x4xf32, #tpu.memory_space<vmem>>, vector<2x4xf32>
      %c0_26 = arith.constant 0 : index
      %c4 = arith.constant 4 : index
      %32 = vector.load %arg4[%c0_26, %c4] : memref<2x8xf32, #tpu.memory_space<vmem>>, vector<2x4xf32>
      tpu.vector_store %arg4[%c0_26, %c4], %31 {strides = array<i32>} : memref<2x8xf32, #tpu.memory_space<vmem>>, vector<2x4xf32>,
    } else {
    }
    return
  }
  func.func @transform_0(%arg0: i32, %arg1: i32) -> (i32, i32, i32) {
    %c0_i32 = arith.constant 0 : i32
    %c0_i32_0 = arith.constant 0 : i32
    return %arg0, %c0_i32, %arg1 : i32, i32, i32
  }
  func.func @transform_1(%arg0: i32, %arg1: i32) -> (i32, i32, i32) {
    %c0_i32 = arith.constant 0 : i32
    %c0_i32_0 = arith.constant 0 : i32
    %c0_i32_1 = arith.constant 0 : i32
    %c0_i32_2 = arith.constant 0 : i32
    return %c0_i32, %c0_i32_0, %c0_i32_1 : i32, i32, i32
  }
  func.func @transform_2(%arg0: i32, %arg1: i32) -> (i32, i32) {
    %c0_i32 = arith.constant 0 : i32
    %c0_i32_0 = arith.constant 0 : i32
    return %arg0, %c0_i32 : i32, i32
  }
}

</mosaic_0001>

<llo_original>
// kernel: tpu_custom_call.1
$region0: #{tpu_custom_call.1}
  #allocation0 [shape = 'u32[]', space=smem, size = 0x4, offset = 0x4, fixed_abs, tag = 'smem constant byte address 0x4 - core index']
  #allocation1 [shape = 'u32[72,128]{1,0:T(1,128)}', space=vmem, size = 0x9000, scoped, tag = 'internal scratch']
  #allocation2 [shape = 'f32[2,4]{1,0:T(2,128)}', space=vmem, size = 0x400, scoped, tag = 'scratch operand']
  #allocation3 [shape = 'f32[2,4]{1,0:T(2,128)}', space=vmem, size = 0x400, scoped, tag = 'scratch operand']
  %s0 = inlined_call_operand.hbm [shape: f32[2,4,256], index: 0, kind: input, shape index: {}]
  %s1 = inlined_call_operand.vmem [shape: f32[1,4,1], index: 1, kind: input, shape index: {}]
  %s2 = inlined_call_operand.hbm [shape: f32[2,8], index: 2, kind: output, shape index: {}]
  %s3 = sld [smem:[#allocation0]]
  $region30: #{tpu_custom_call.1} parent=0
    _
  %s5 = ssub.s32 1, %s3
  %s6 = scalar_select 0, %s5, %s3
  $region1: #{tpu_custom_call.1} parent=0
    #allocation4 [shape = 'u8[8192]{0}', space=vmem, size = 0x2000, scoped, tag = 'input window, operand 0, single buffered']
    #allocation5 [shape = 's32[1]{0}', space=sflag, size = 0x4, scoped, tag = 'scoped memory for tpu_custom_call.1']
    #allocation6 [shape = 's32[1]{0}', space=sflag, size = 0x4, scoped, tag = 'scoped memory for tpu_custom_call.1']
    #allocation7 [shape = 'u8[1024]{0}', space=vmem, size = 0x400, scoped, tag = 'output window, operand 0, single buffered']
    %7 = vsyncpa [#allocation5], 0
    %8 = vsyncpa [#allocation6], 0
    // Predicated region
    $region2: #{tpu_custom_call.1} parent=1 // pred_check
      _
    $region3: #{tpu_custom_call.1} parent=1 // pred_check_branch
      %10 = sbr.rel (0) target = $region5
    $region4: #{tpu_custom_call.1} parent=1 // pred_region
      %12 = vsyncadd [#allocation5], 0
      %s13 = sshll.u32 %s0, 4
      %s14 = int_to_ptr.hbm [resolvable:$true] %s13
      %s15 = sshll.u32 [#allocation4], 4
      %s16 = int_to_ptr.vmem [resolvable:$true] %s15
      %21 = dma.hbm_to_vmem [thread:$0]  %s14, 256, %s16, [#allocation5], 128, 128, 8
    $region5: #{tpu_custom_call.1} parent=1 // pred_fallthru
      _
    // Predicated region
    $region6: #{tpu_custom_call.1} parent=1 // pred_check
      _
    $region7: #{tpu_custom_call.1} parent=1 // pred_check_branch
      %23 = sbr.rel (0) target = $region9
    $region8: #{tpu_custom_call.1} parent=1 // pred_region
      _
    $region9: #{tpu_custom_call.1} parent=1 // pred_fallthru
      _
    // Predicated region
    $region10: #{tpu_custom_call.1} parent=1 // pred_check
      _
    $region11: #{tpu_custom_call.1} parent=1 // pred_check_branch
      %25 = sbr.rel (0) target = $region13
    $region12: #{tpu_custom_call.1} parent=1 // pred_region
      %27 = dma.done [#allocation5], 256
    $region13: #{tpu_custom_call.1} parent=1 // pred_fallthru
      _
    %p28 = scmp.eq.s32.totalorder 0, 0
    // Predicated region
    $region14: #{tpu_custom_call.1} parent=1 // pred_check
      %p29 = pneg %p28
    $region15: #{tpu_custom_call.1} parent=1 // pred_check_branch
      %31 = sbr.rel (%p29) target = $region17
    $region16: #{tpu_custom_call.1} parent=1 // pred_region
      %vm32 = vcmask 25600
      %33 = vst.msk [vmem:[#allocation2] sm:$0x3] %vm32, 0.0
      %34 = vst.msk [vmem:[#allocation3] sm:$0x3] %vm32, 0.0
    $region17: #{tpu_custom_call.1} parent=1 // pred_fallthru
      _
    %v35 = vld [vmem:[#allocation4] sm:$0xff]
    %v36 = vld [vmem:[#allocation4 + $0x8] sm:$0xff]
    %v37 = vld [vmem:[%s1] sm:$0xf]
    %v38 = vld [vmem:[#allocation2] sm:$0x3]
    %41 = vst [vmem:[#allocation1] ss:$2 sm:$0xff] %v35
    %v42 = vld.sshfl [vmem:[#allocation1] sm:$0xff pattern:$0x75316420]
    %v43 = vld.sshfl [vmem:[#allocation1 + $0x8] sm:$0xff pattern:$0x75316420]
    %s44 = scalar_lea.vmem [#allocation1], 16
    %45 = vst [vmem:[%s44] ss:$2 sm:$0xff] %v36
    %v46 = vld.sshfl [vmem:[#allocation1 + $0x10] sm:$0xff pattern:$0x75316420]
    %v47 = vld.sshfl [vmem:[#allocation1 + $0x18] sm:$0xff pattern:$0x75316420]
    %vm52 = vcmask 1043456
    %v53 = vsel %vm52, %v42, 0.0
    %v54 = vsel %vm52, %v43, 0.0
    %v55 = vadd.f32 %v53, %v54
    %56 = vadd.xlane.f32.xlu0 %v55
    %v57 = vpop.xlane.xlu0 %56
    %v58 = vsel %vm52, %v46, 0.0
    %v59 = vsel %vm52, %v47, 0.0
    %v60 = vadd.f32 %v58, %v59
    %61 = vadd.xlane.f32.xlu0 %v60
    %v62 = vpop.xlane.xlu0 %61
    %v65 = vlaneseq
    %v66 = vand.u32 %v65, 127
    %v67 = vperm.slane %v57, %v66
    %v68 = vperm.slane %v62, %v66
    %vm69 = vcmask 1041409
    %v70 = vsel %vm69, %v68, %v67
    %v72 = vadd.f32 %v38, %v70
    %vm73 = vcmask 25600
    %74 = vst.msk [vmem:[#allocation2] sm:$0x3] %vm73, %v72
    %76 = vset.pattern.permute.xlu0 0
    %77 = vperm.xlu0 %76, %v37
    %v78 = vpop.permute.xlu0 %77
    %v80 = vunpack.c.l.s4 839922192
    %v81 = vunpack.c.0.s8 %v80
    %v82 = vperm.slane %v78, %v81
    %v84 = vmul.f32 %v35, %v82
    %v85 = vmul.f32 %v36, %v82
    %88 = vst [vmem:[#allocation1] ss:$2 sm:$0xff] %v84
    %v89 = vld.sshfl [vmem:[#allocation1] sm:$0xff pattern:$0x75316420]
    %v90 = vld.sshfl [vmem:[#allocation1 + $0x8] sm:$0xff pattern:$0x75316420]
    %s91 = scalar_lea.vmem [#allocation1], 16
    %92 = vst [vmem:[%s91] ss:$2 sm:$0xff] %v85
    %v93 = vld.sshfl [vmem:[#allocation1 + $0x10] sm:$0xff pattern:$0x75316420]
    %v94 = vld.sshfl [vmem:[#allocation1 + $0x18] sm:$0xff pattern:$0x75316420]
    %v99 = vsel %vm52, %v89, 0.0
    %v100 = vrot.slane %v99, 4
    %v101 = vadd.f32 %v99, %v100
    %v102 = vrot.slane %v101, 2
    %v103 = vadd.f32 %v101, %v102
    %v104 = vrot.slane %v103, 1
    %v105 = vadd.f32 %v103, %v104
    %v106 = vsel %vm52, %v90, 0.0
    %v107 = vrot.slane %v106, 4
    %v108 = vadd.f32 %v106, %v107
    %v109 = vrot.slane %v108, 2
    %v110 = vadd.f32 %v108, %v109
    %v111 = vrot.slane %v110, 1
    %v112 = vadd.f32 %v110, %v111
    %v113 = vsel %vm52, %v93, 0.0
    %v114 = vrot.slane %v113, 4
    %v115 = vadd.f32 %v113, %v114
    %v116 = vrot.slane %v115, 2
    %v117 = vadd.f32 %v115, %v116
    %v118 = vrot.slane %v117, 1
    %v119 = vadd.f32 %v117, %v118
    %v120 = vsel %vm52, %v94, 0.0
    %v121 = vrot.slane %v120, 4
    %v122 = vadd.f32 %v120, %v121
    %v123 = vrot.slane %v122, 2
    %v124 = vadd.f32 %v122, %v123
    %v125 = vrot.slane %v124, 1
    %v126 = vadd.f32 %v124, %v125
    %v127 = vxor.u32 %v105, 2147483648
    %v128 = vxor.u32 %v112, 2147483648
    %v129 = vxor.u32 %v119, 2147483648
    %v130 = vxor.u32 %v126, 2147483648
    %v131 = vmul.f32 %v127, 1.442695
    %v132 = vpow.pop %v131
    %v133 = vmul.f32 %v128, 1.442695
    %v134 = vpow.pop %v133
    %v135 = vmul.f32 %v129, 1.442695
    %v136 = vpow.pop %v135
    %v137 = vmul.f32 %v130, 1.442695
    %v138 = vpow.pop %v137
    %v139 = vadd.f32 %v132, 1.0
    %v140 = vadd.f32 %v134, 1.0
    %v141 = vadd.f32 %v136, 1.0
    %v142 = vadd.f32 %v138, 1.0
    %v143 = vrcp.pop %v139
    %v144 = vmul.f32 %v139, %v143
    %v145 = vsub.f32 1.0, %v144
    %v146 = vmul.f32 %v143, %v145
    %v147 = vadd.f32 %v143, %v146
    %vm148 = vweird.f32 %v139
    %vm149 = vweird.f32 %v143
    %vm150 = vmor %vm148, %vm149
    %v151 = vsel %vm150, %v143, %v147
    %v152 = vand.u32 2147483647, %v139
    %vm153 = vcmp.eq.f32.partialorder %v152, 8.507059e+37
    %v154 = vand.u32 %v139, 2147483648
    %v155 = vor.u32 1.1754944e-38, %v154
    %v156 = vsel %vm153, %v155, %v151
    %v157 = vmul.f32 1.0, %v156
    %v158 = vrcp.pop %v140
    %v159 = vmul.f32 %v140, %v158
    %v160 = vsub.f32 1.0, %v159
    %v161 = vmul.f32 %v158, %v160
    %v162 = vadd.f32 %v158, %v161
    %vm163 = vweird.f32 %v140
    %vm164 = vweird.f32 %v158
    %vm165 = vmor %vm163, %vm164
    %v166 = vsel %vm165, %v158, %v162
    %v167 = vand.u32 2147483647, %v140
    %vm168 = vcmp.eq.f32.partialorder %v167, 8.507059e+37
    %v169 = vand.u32 %v140, 2147483648
    %v170 = vor.u32 1.1754944e-38, %v169
    %v171 = vsel %vm168, %v170, %v166
    %v172 = vmul.f32 1.0, %v171
    %v173 = vrcp.pop %v141
    %v174 = vmul.f32 %v141, %v173
    %v175 = vsub.f32 1.0, %v174
    %v176 = vmul.f32 %v173, %v175
    %v177 = vadd.f32 %v173, %v176
    %vm178 = vweird.f32 %v141
    %vm179 = vweird.f32 %v173
    %vm180 = vmor %vm178, %vm179
    %v181 = vsel %vm180, %v173, %v177
    %v182 = vand.u32 2147483647, %v141
    %vm183 = vcmp.eq.f32.partialorder %v182, 8.507059e+37
    %v184 = vand.u32 %v141, 2147483648
    %v185 = vor.u32 1.1754944e-38, %v184
    %v186 = vsel %vm183, %v185, %v181
    %v187 = vmul.f32 1.0, %v186
    %v188 = vrcp.pop %v142
    %v189 = vmul.f32 %v142, %v188
    %v190 = vsub.f32 1.0, %v189
    %v191 = vmul.f32 %v188, %v190
    %v192 = vadd.f32 %v188, %v191
    %vm193 = vweird.f32 %v142
    %vm194 = vweird.f32 %v188
    %vm195 = vmor %vm193, %vm194
    %v196 = vsel %vm195, %v188, %v192
    %v197 = vand.u32 2147483647, %v142
    %vm198 = vcmp.eq.f32.partialorder %v197, 8.507059e+37
    %v199 = vand.u32 %v142, 2147483648
    %v200 = vor.u32 1.1754944e-38, %v199
    %v201 = vsel %vm198, %v200, %v196
    %v202 = vmul.f32 1.0, %v201
    %v203 = vld [vmem:[#allocation3] sm:$0x3]
    %v208 = vrot.slane %v172, 4
    %v209 = vrot.slane %v202, 4
    %v210 = vsel %vm52, %v157, %v208
    %v211 = vsel %vm52, %v187, %v209
    %v214 = vmul.f32 %v35, %v210
    %v215 = vmul.f32 %v36, %v211
    %218 = vst [vmem:[#allocation1] ss:$2 sm:$0xff] %v214
    %v219 = vld.sshfl [vmem:[#allocation1] sm:$0xff pattern:$0x75316420]
    %v220 = vld.sshfl [vmem:[#allocation1 + $0x8] sm:$0xff pattern:$0x75316420]
    %s221 = scalar_lea.vmem [#allocation1], 16
    %222 = vst [vmem:[%s221] ss:$2 sm:$0xff] %v215
    %v223 = vld.sshfl [vmem:[#allocation1 + $0x10] sm:$0xff pattern:$0x75316420]
    %v224 = vld.sshfl [vmem:[#allocation1 + $0x18] sm:$0xff pattern:$0x75316420]
    %v229 = vsel %vm52, %v219, 0.0
    %v230 = vsel %vm52, %v220, 0.0
    %v231 = vadd.f32 %v229, %v230
    %232 = vadd.xlane.f32.xlu0 %v231
    %v233 = vpop.xlane.xlu0 %232
    %v234 = vsel %vm52, %v223, 0.0
    %v235 = vsel %vm52, %v224, 0.0
    %v236 = vadd.f32 %v234, %v235
    %237 = vadd.xlane.f32.xlu0 %v236
    %v238 = vpop.xlane.xlu0 %237
    %v241 = vperm.slane %v233, %v66
    %v242 = vperm.slane %v238, %v66
    %v243 = vsel %vm69, %v242, %v241
    %v245 = vadd.f32 %v203, %v243
    %246 = vst.msk [vmem:[#allocation3] sm:$0x3] %vm73, %v245
    // Predicated region
    $region18: #{tpu_custom_call.1} parent=1 // pred_check
      %p247 = pneg %p28
    $region19: #{tpu_custom_call.1} parent=1 // pred_check_branch
      %249 = sbr.rel (%p247) target = $region21
    $region20: #{tpu_custom_call.1} parent=1 // pred_region
      %v250 = vld [vmem:[#allocation2] sm:$0x3]
      %v251 = vmul.f32 %v250, 0.00390625
      %252 = vst.msk [vmem:[#allocation7] sm:$0x3] %vm73, %v251
      %v253 = vld [vmem:[#allocation3] sm:$0x3]
      %255 = vrot.lane.b32.xlu0 %v253, 4
      %v256 = vpop.permute.xlu0 %255
      %vm258 = vcmask 58400
      %259 = vst.msk [vmem:[#allocation7] sm:$0x3] %vm258, %v256
    $region21: #{tpu_custom_call.1} parent=1 // pred_fallthru
      _
    // Predicated region
    $region22: #{tpu_custom_call.1} parent=1 // pred_check
      _
    $region23: #{tpu_custom_call.1} parent=1 // pred_check_branch
      %261 = sbr.rel (0) target = $region25
    $region24: #{tpu_custom_call.1} parent=1 // pred_region
      %263 = vsyncadd [#allocation6], 0
      %s265 = sshll.u32 [#allocation7], 4
      %s266 = int_to_ptr.vmem [resolvable:$true] %s265
      %s267 = sshll.u32 %s2, 4
      %s268 = int_to_ptr.hbm [resolvable:$true] %s267
      %270 = dma.vmem_to_hbm [thread:$0]  %s266, 32, %s268, [#allocation6]
    $region25: #{tpu_custom_call.1} parent=1 // pred_fallthru
      _
    // Predicated region
    $region26: #{tpu_custom_call.1} parent=1 // pred_check
      _
    $region27: #{tpu_custom_call.1} parent=1 // pred_check_branch
      %272 = sbr.rel (0) target = $region29
    $region28: #{tpu_custom_call.1} parent=1 // pred_region
      %274 = dma.done [#allocation6], 32
    $region29: #{tpu_custom_call.1} parent=1 // pred_fallthru
      _
    %275 = vsyncpa [#allocation5], 1
    %276 = vsyncpa [#allocation6], 1

</llo_original>
